<compile_context>
chip_gen: v7x
topology: tpu7x:2x2x1
jax: 0.10.0
libtpu: 0.0.40
codegen_flags: <defaults>
</compile_context>

<pallas_src>
import numpy as np
import jax
import jax.numpy as jnp
from jax.experimental import pallas as pl
from jax.experimental.pallas import tpu as pltpu

# TODO(synk): 'mobilevit_s' (timm, pretrained, features_only, out_indices=(3,)) backbone is
# not translated; kernel starts from its (B, 128, H/16, W/16) feature map.

LATENT = 4     # latent_size
MAP = 16       # map_size
CIN = 128      # mobilevit_s feature channels at out_indices=(3,)
BN_EPS = 1e-5


def _adaptive_pool_tables(in_h, in_w, out_h, out_w):
    """AdaptiveAvgPool2d as (HW, M2) 0/1 membership (int8) + (1, M2) 1/count (f32)."""
    sel = np.zeros((in_h * in_w, out_h * out_w), dtype=np.int8)
    cnt = np.zeros((out_h * out_w,), dtype=np.float32)
    for oi in range(out_h):
        hs = (oi * in_h) // out_h
        he = -(-((oi + 1) * in_h) // out_h)   # ceil
        for oj in range(out_w):
            ws = (oj * in_w) // out_w
            we = -(-((oj + 1) * in_w) // out_w)
            q = oi * out_w + oj
            cnt[q] = float((he - hs) * (we - ws))
            for hi in range(hs, he):
                for wi in range(ws, we):
                    sel[hi * in_w + wi, q] = 1
    return jnp.asarray(sel), jnp.asarray((1.0 / cnt).reshape(1, -1))


def _head_kernel(x_ref, w_ref, shift_ref, pool_ref, invcnt_ref, o_ref):
    # x_ref:      (1, Cin, HW)  one batch element, NCHW-flattened (channel-major)
    # w_ref:      (Cout, Cin)   1x1 conv weight with BN scale folded in
    # shift_ref:  (Cout, 1)     folded conv-bias + eval-mode BatchNorm shift
    # pool_ref:   (HW, M2)      int8 0/1 adaptive-pool membership matrix
    # invcnt_ref: (1, M2)       per output window 1/count
    # o_ref:      (1, Cout, M2)
    x = x_ref[0]                                                       # (Cin, HW)
    y = jnp.dot(w_ref[...], x, preferred_element_type=jnp.float32)     # 1x1 conv (MXU)
    y = jnp.maximum(y + shift_ref[...], 0.0)                           # BN shift + ReLU
    pool = pool_ref[...].astype(jnp.float32)                           # dequant 0/1
    pooled = jnp.dot(y, pool, preferred_element_type=jnp.float32)      # window sums (MXU)
    o_ref[0] = pooled * invcnt_ref[...]                                # -> window means


def transformer_encoder_head(feat_nchw, conv_w, conv_b, bn_gamma, bn_beta,
                             bn_mean, bn_var, map_size=MAP, eps=BN_EPS):
    B, Cin, H, W = feat_nchw.shape
    Cout = conv_w.shape[0]
    HW = H * W
    M2 = map_size * map_size

    # Host-side glue: pure reshapes (no transposes) + parameter folding.
    x = feat_nchw.reshape(B, Cin, HW)
    s = bn_gamma / jnp.sqrt(bn_var + eps)
    w_scaled = (conv_w.reshape(Cout, Cin) * s[:, None]).astype(jnp.float32)   # (Cout, Cin)
    shift = (s * conv_b + bn_beta - s * bn_mean).reshape(Cout, 1).astype(jnp.float32)
    pool01, invcnt = _adaptive_pool_tables(H, W, map_size, map_size)

    out = pl.pallas_call(
        _head_kernel,
        out_shape=jax.ShapeDtypeStruct((B, Cout, M2), jnp.float32),
        grid_spec=pltpu.PrefetchScalarGridSpec(
            num_scalar_prefetch=0,
            grid=(B,),
            in_specs=[
                pl.BlockSpec((1, Cin, HW), lambda b: (b, 0, 0)),
                pl.BlockSpec((Cout, Cin), lambda b: (0, 0)),   # grid-invariant: fetched once
                pl.BlockSpec((Cout, 1), lambda b: (0, 0)),     # grid-invariant: fetched once
                pl.BlockSpec((HW, M2), lambda b: (0, 0)),      # grid-invariant: fetched once
                pl.BlockSpec((1, M2), lambda b: (0, 0)),       # grid-invariant: fetched once
            ],
            out_specs=pl.BlockSpec((1, Cout, M2), lambda b: (b, 0, 0)),
        ),
        compiler_params=pltpu.CompilerParams(dimension_semantics=("parallel",)),
    )(x, w_scaled, shift, pool01, invcnt)

    # (B, Cout, M2) is already channel-major: free reshape to NCHW.
    return out.reshape(B, Cout, map_size, map_size)


def _reference(feat, conv_w, conv_b, gamma, beta, mean, var, map_size=MAP, eps=BN_EPS):
    """Pure-JAX reference of additional_layers (eval-mode BN)."""
    y = jnp.einsum('bchw,oc->bohw', feat, conv_w.reshape(conv_w.shape[0], -1))
    y = y + conv_b[None, :, None, None]
    y = (gamma[None, :, None, None] * (y - mean[None, :, None, None])
         / jnp.sqrt(var + eps)[None, :, None, None] + beta[None, :, None, None])
    y = jnp.maximum(y, 0.0)
    B, C, H, W = y.shape
    fh, fw = H // map_size, W // map_size
    return y.reshape(B, C, map_size, fh, map_size, fw).mean(axis=(3, 5))


if __name__ == "__main__":
    key = jax.random.PRNGKey(0)
    kx, kw, kb, kg, kbe, km, kv = jax.random.split(key, 7)

    # Backbone feature map at stride 16 for img_size (256, 512): (B, 128, 16, 32).
    B, H, W = 2, 16, 32
    feat = jax.random.normal(kx, (B, CIN, H, W), dtype=jnp.float32)

    # Deterministic parameter init (shapes from the module's __init__).
    conv_w = 0.05 * jax.random.normal(kw, (LATENT, CIN, 1, 1), dtype=jnp.float32)
    conv_b = 0.1 * jax.random.normal(kb, (LATENT,), dtype=jnp.float32)
    bn_gamma = 1.0 + 0.1 * jax.random.normal(kg, (LATENT,), dtype=jnp.float32)
    bn_beta = 0.1 * jax.random.normal(kbe, (LATENT,), dtype=jnp.float32)
    bn_mean = 0.1 * jax.random.normal(km, (LATENT,), dtype=jnp.float32)
    bn_var = jnp.abs(jax.random.normal(kv, (LATENT,), dtype=jnp.float32)) + 0.5

    out = transformer_encoder_head(feat, conv_w, conv_b, bn_gamma, bn_beta, bn_mean, bn_var)
    out = jax.block_until_ready(out)

    ref = _reference(feat, conv_w, conv_b, bn_gamma, bn_beta, bn_mean, bn_var)
    assert out.shape == (B, LATENT, MAP, MAP), out.shape
    np.testing.assert_allclose(np.asarray(out), np.asarray(ref), rtol=1e-4, atol=1e-4)

    print("KERNEL_OK")
</pallas_src>

<mosaic_0001>
module attributes {stable_mosaic.version = 11 : i64} {
  func.func @_head_kernel(%arg0: i32, %arg1: memref<1x128x512xf32, #tpu.memory_space<vmem>>, %arg2: memref<4x128xf32, #tpu.memory_space<vmem>>, %arg3: memref<4x1xf32, #tpu.memory_space<vmem>>, %arg4: memref<512x256xi8, #tpu.memory_space<vmem>>, %arg5: memref<1x256xf32, #tpu.memory_space<vmem>>, %arg6: memref<1x4x256xf32, #tpu.memory_space<vmem>>) attributes {dimension_semantics = [#tpu.dimension_semantics<parallel>], iteration_bounds = array<i64: 2>, scalar_prefetch = 0 : i64, scratch_operands = 0 : i64, tpu.core_type = #tpu.core_type<tc>, window_params = [{transform_indices = @transform_0, window_bounds = array<i64: 1, 128, 512>}, {pipeline_mode = #tpu.pipeline_mode<synchronous>, transform_indices = @transform_1, window_bounds = array<i64: 4, 128>}, {pipeline_mode = #tpu.pipeline_mode<synchronous>, transform_indices = @transform_2, window_bounds = array<i64: 4, 1>}, {pipeline_mode = #tpu.pipeline_mode<synchronous>, transform_indices = @transform_3, window_bounds = array<i64: 512, 256>}, {pipeline_mode = #tpu.pipeline_mode<synchronous>, transform_indices = @transform_4, window_bounds = array<i64: 1, 256>}, {transform_indices = @transform_5, window_bounds = array<i64: 1, 4, 256>}]} {
    %c0 = arith.constant 0 : index
    %c0_0 = arith.constant 0 : index
    %c0_1 = arith.constant 0 : index
    %0 = vector.load %arg1[%c0, %c0_0, %c0_1] : memref<1x128x512xf32, #tpu.memory_space<vmem>>, vector<1x128x512xf32>
    %1 = vector.shape_cast %0 : vector<1x128x512xf32> to vector<128x512xf32>
    %c0_2 = arith.constant 0 : index
    %c0_3 = arith.constant 0 : index
    %2 = vector.load %arg2[%c0_2, %c0_3] : memref<4x128xf32, #tpu.memory_space<vmem>>, vector<4x128xf32>
    %cst = arith.constant dense<0.000000e+00> : vector<4x512xf32>
    %3 = tpu.matmul %2, %1, %cst {dimension_numbers = #tpu.dot_dimension_numbers<[1], [0], [0], [1], [0, 0, 1, 1], [], []>} : vector<4x128xf32>, vector<128x512xf32>, vector<4x512xf32> -> vector<4x512xf32>
    %c0_4 = arith.constant 0 : index
    %c0_5 = arith.constant 0 : index
    %4 = vector.load %arg3[%c0_4, %c0_5] : memref<4x1xf32, #tpu.memory_space<vmem>>, vector<4x1xf32>
    %5 = vector.broadcast %4 : vector<4x1xf32> to vector<4x512xf32>
    %6 = arith.addf %3, %5 : vector<4x512xf32>
    %cst_6 = arith.constant 0.000000e+00 : f32
    %7 = vector.broadcast %cst_6 : f32 to vector<4x512xf32>
    %8 = arith.maximumf %6, %7 : vector<4x512xf32>
    %c0_7 = arith.constant 0 : index
    %c0_8 = arith.constant 0 : index
    %9 = vector.load %arg4[%c0_7, %c0_8] : memref<512x256xi8, #tpu.memory_space<vmem>>, vector<512x256xi8>
    %10 = arith.sitofp %9 : vector<512x256xi8> to vector<512x256xf32>
    %cst_9 = arith.constant dense<0.000000e+00> : vector<4x256xf32>
    %11 = tpu.matmul %8, %10, %cst_9 {dimension_numbers = #tpu.dot_dimension_numbers<[1], [0], [0], [1], [0, 0, 1, 1], [], []>} : vector<4x512xf32>, vector<512x256xf32>, vector<4x256xf32> -> vector<4x256xf32>
    %c0_10 = arith.constant 0 : index
    %c0_11 = arith.constant 0 : index
    %12 = vector.load %arg5[%c0_10, %c0_11] : memref<1x256xf32, #tpu.memory_space<vmem>>, vector<1x256xf32>
    %13 = vector.broadcast %12 : vector<1x256xf32> to vector<4x256xf32>
    %14 = arith.mulf %11, %13 : vector<4x256xf32>
    %c0_12 = arith.constant 0 : index
    %c0_13 = arith.constant 0 : index
    %c0_14 = arith.constant 0 : index
    %15 = vector.load %arg6[%c0_12, %c0_13, %c0_14] : memref<1x4x256xf32, #tpu.memory_space<vmem>>, vector<1x4x256xf32>
    %16 = vector.shape_cast %15 : vector<1x4x256xf32> to vector<4x256xf32>
    %17 = vector.shape_cast %14 : vector<4x256xf32> to vector<1x4x256xf32>
    tpu.vector_store %arg6[%c0_12, %c0_13, %c0_14], %17 {strides = array<i32>} : memref<1x4x256xf32, #tpu.memory_space<vmem>>, vector<1x4x256xf32>,
    return
  }
  func.func @transform_0(%arg0: i32) -> (i32, i32, i32) {
    %c0_i32 = arith.constant 0 : i32
    %c0_i32_0 = arith.constant 0 : i32
    %c0_i32_1 = arith.constant 0 : i32
    return %arg0, %c0_i32, %c0_i32_0 : i32, i32, i32
  }
  func.func @transform_1(%arg0: i32) -> (i32, i32) {
    %c0_i32 = arith.constant 0 : i32
    %c0_i32_0 = arith.constant 0 : i32
    %c0_i32_1 = arith.constant 0 : i32
    return %c0_i32, %c0_i32_0 : i32, i32
  }
  func.func @transform_2(%arg0: i32) -> (i32, i32) {
    %c0_i32 = arith.constant 0 : i32
    %c0_i32_0 = arith.constant 0 : i32
    %c0_i32_1 = arith.constant 0 : i32
    return %c0_i32, %c0_i32_0 : i32, i32
  }
  func.func @transform_3(%arg0: i32) -> (i32, i32) {
    %c0_i32 = arith.constant 0 : i32
    %c0_i32_0 = arith.constant 0 : i32
    %c0_i32_1 = arith.constant 0 : i32
    return %c0_i32, %c0_i32_0 : i32, i32
  }
  func.func @transform_4(%arg0: i32) -> (i32, i32) {
    %c0_i32 = arith.constant 0 : i32
    %c0_i32_0 = arith.constant 0 : i32
    %c0_i32_1 = arith.constant 0 : i32
    return %c0_i32, %c0_i32_0 : i32, i32
  }
  func.func @transform_5(%arg0: i32) -> (i32, i32, i32) {
    %c0_i32 = arith.constant 0 : i32
    %c0_i32_0 = arith.constant 0 : i32
    %c0_i32_1 = arith.constant 0 : i32
    return %arg0, %c0_i32, %c0_i32_0 : i32, i32, i32
  }
}

</mosaic_0001>

<llo_original>
// kernel: tpu_custom_call.1
$region0: #{tpu_custom_call.1}
  #allocation0 [shape = 'u32[]', space=smem, size = 0x4, offset = 0x4, fixed_abs, tag = 'smem constant byte address 0x4 - core index']
  #allocation1 [shape = 'u32[144,128]{1,0:T(1,128)}', space=vmem, size = 0x12000, scoped, tag = 'internal scratch']
  %s0 = inlined_call_operand.hbm [shape: f32[2,128,512], index: 0, kind: input, shape index: {}]
  %s1 = inlined_call_operand.vmem [shape: f32[4,128], index: 1, kind: input, shape index: {}]
  %s2 = inlined_call_operand.vmem [shape: f32[4,1], index: 2, kind: input, shape index: {}]
  %s3 = inlined_call_operand.hbm [shape: s8[512,256], index: 3, kind: input, shape index: {}]
  %s4 = inlined_call_operand.vmem [shape: f32[1,256], index: 4, kind: input, shape index: {}]
  %s5 = inlined_call_operand.hbm [shape: f32[2,4,256], index: 5, kind: output, shape index: {}]
  %s6 = sld [smem:[#allocation0]]
  $region61: #{tpu_custom_call.1} parent=0
    _
  %s8 = ssub.s32 1, %s6
  %s9 = scalar_select 0, %s8, %s6
  $region1: #{tpu_custom_call.1} parent=0
    #allocation2 [shape = 'u8[524288]{0}', space=vmem, size = 0x80000, scoped, tag = 'input window, operand 0']
    #allocation3 [shape = 's32[2]{0}', space=sflag, size = 0x8, scoped, tag = 'scoped memory for tpu_custom_call.1']
    #allocation4 [shape = 's32[2]{0}', space=sflag, size = 0x8, scoped, tag = 'scoped memory for tpu_custom_call.1']
    #allocation5 [shape = 'u8[131072]{0}', space=vmem, size = 0x20000, scoped, tag = 'input window, operand 3, single buffered']
    #allocation6 [shape = 's32[1]{0}', space=sflag, size = 0x4, scoped, tag = 'scoped memory for tpu_custom_call.1']
    #allocation7 [shape = 'u8[8192]{0}', space=vmem, size = 0x2000, scoped, tag = 'output window, operand 0']
    %10 = vsyncpa [#allocation3], 0
    %s11 = scalar_lea.sflag [#allocation3], 1
    %12 = vsyncpa %s11, 0
    %13 = vsyncpa [#allocation6], 0
    %14 = vsyncpa [#allocation4], 0
    %s15 = scalar_lea.sflag [#allocation4], 1
    %16 = vsyncpa %s15, 0
    loop: start=0, step=1, limit=4
    $region2: #{tpu_custom_call.1} parent=1 // loop_pre_header
      _
    $region3: #{tpu_custom_call.1} parent=1 // loop_header
      %s18 = sphi 0, %s22
      %p19 = scmp.ge.s32.totalorder %s18, 4
      %s28 = sphi 0, %s30
      %s31 = sphi 0, %s28
      %s32 = sphi 0, %s31
      %s48 = sphi 0, %s32
      %s52 = sphi 0, %s52
      %s54 = sphi 0, %s52
      %s55 = sphi 0, %s54
      %s69 = sphi 0, %s55
      %s73 = sphi 0, %s73
      %s75 = sphi 0, %s73
      %s76 = sphi 0, %s75
      %s90 = sphi 0, %s76
      %s94 = sphi 0, %s94
      %s96 = sphi 0, %s94
      %s97 = sphi 0, %s96
      %s111 = sphi 0, %s97
      %s115 = sphi 0, %s115
      %s117 = sphi 0, %s115
      %s118 = sphi 0, %s117
      %s132 = sphi 0, %s118
      %s138 = sphi 0, %s140
      %s141 = sphi 0, %s138
      %s142 = sphi 0, %s141
      %s158 = sphi 0, %s142
    $region4: #{tpu_custom_call.1} parent=1 // loop_header_branch
      %21 = sbr.rel (%p19) target = $region8
    $region5: #{tpu_custom_call.1} parent=1 // loop_body
      %s23 = ssub.s32 %s18, 1
      %s24 = ssub.s32 %s18, 2
      %s25 = sadd.s32 %s18, 1
      %s26 = ssub.s32 %s18, %s25
      %p27 = scmp.eq.s32.totalorder %s26, 0
      %s29 = sadd.s32 %s28, 1
      %s30 = scalar_select %p27, %s28, %s29
      %p33 = pneg %p27
      %p34 = scmp.eq.s32.totalorder %s18, 1
      %p35 = por %p33, %p34
      %p36 = scmp.ne.s32.totalorder %s28, %s31
      %p37 = scmp.eq.s32.totalorder %s18, 0
      %p38 = por %p36, %p37
      %p39 = scmp.ne.s32.totalorder %s28, %s31
      %p40 = scmp.eq.s32.totalorder %s23, 1
      %p41 = por %p39, %p40
      %p42 = scmp.ne.s32.totalorder %s31, %s32
      %p43 = scmp.eq.s32.totalorder %s23, 0
      %p44 = por %p42, %p43
      %p45 = scmp.ne.s32.totalorder %s31, %s32
      %p46 = scmp.eq.s32.totalorder %s24, 1
      %p47 = por %p45, %p46
      %p49 = scmp.ne.s32.totalorder %s32, %s48
      %p50 = scmp.eq.s32.totalorder %s24, 0
      %p51 = por %p49, %p50
      %s53 = sadd.s32 %s52, 1
      %p56 = scmp.eq.s32.totalorder %s18, 1
      %p57 = scmp.ne.s32.totalorder %s52, %s54
      %p58 = scmp.eq.s32.totalorder %s18, 0
      %p59 = por %p57, %p58
      %p60 = scmp.ne.s32.totalorder %s52, %s54
      %p61 = scmp.eq.s32.totalorder %s23, 1
      %p62 = por %p60, %p61
      %p63 = scmp.ne.s32.totalorder %s54, %s55
      %p64 = scmp.eq.s32.totalorder %s23, 0
      %p65 = por %p63, %p64
      %p66 = scmp.ne.s32.totalorder %s54, %s55
      %p67 = scmp.eq.s32.totalorder %s24, 1
      %p68 = por %p66, %p67
      %p70 = scmp.ne.s32.totalorder %s55, %s69
      %p71 = scmp.eq.s32.totalorder %s24, 0
      %p72 = por %p70, %p71
      %s74 = sadd.s32 %s73, 1
      %p77 = scmp.eq.s32.totalorder %s18, 1
      %p78 = scmp.ne.s32.totalorder %s73, %s75
      %p79 = scmp.eq.s32.totalorder %s18, 0
      %p80 = por %p78, %p79
      %p81 = scmp.ne.s32.totalorder %s73, %s75
      %p82 = scmp.eq.s32.totalorder %s23, 1
      %p83 = por %p81, %p82
      %p84 = scmp.ne.s32.totalorder %s75, %s76
      %p85 = scmp.eq.s32.totalorder %s23, 0
      %p86 = por %p84, %p85
      %p87 = scmp.ne.s32.totalorder %s75, %s76
      %p88 = scmp.eq.s32.totalorder %s24, 1
      %p89 = por %p87, %p88
      %p91 = scmp.ne.s32.totalorder %s76, %s90
      %p92 = scmp.eq.s32.totalorder %s24, 0
      %p93 = por %p91, %p92
      %s95 = sadd.s32 %s94, 1
      %p98 = scmp.eq.s32.totalorder %s18, 1
      %p99 = scmp.ne.s32.totalorder %s94, %s96
      %p100 = scmp.eq.s32.totalorder %s18, 0
      %p101 = por %p99, %p100
      %p102 = scmp.ne.s32.totalorder %s94, %s96
      %p103 = scmp.eq.s32.totalorder %s23, 1
      %p104 = por %p102, %p103
      %p105 = scmp.ne.s32.totalorder %s96, %s97
      %p106 = scmp.eq.s32.totalorder %s23, 0
      %p107 = por %p105, %p106
      %p108 = scmp.ne.s32.totalorder %s96, %s97
      %p109 = scmp.eq.s32.totalorder %s24, 1
      %p110 = por %p108, %p109
      %p112 = scmp.ne.s32.totalorder %s97, %s111
      %p113 = scmp.eq.s32.totalorder %s24, 0
      %p114 = por %p112, %p113
      %s116 = sadd.s32 %s115, 1
      %p119 = scmp.eq.s32.totalorder %s18, 1
      %p120 = scmp.ne.s32.totalorder %s115, %s117
      %p121 = scmp.eq.s32.totalorder %s18, 0
      %p122 = por %p120, %p121
      %p123 = scmp.ne.s32.totalorder %s115, %s117
      %p124 = scmp.eq.s32.totalorder %s23, 1
      %p125 = por %p123, %p124
      %p126 = scmp.ne.s32.totalorder %s117, %s118
      %p127 = scmp.eq.s32.totalorder %s23, 0
      %p128 = por %p126, %p127
      %p129 = scmp.ne.s32.totalorder %s117, %s118
      %p130 = scmp.eq.s32.totalorder %s24, 1
      %p131 = por %p129, %p130
      %p133 = scmp.ne.s32.totalorder %s118, %s132
      %p134 = scmp.eq.s32.totalorder %s24, 0
      %p135 = por %p133, %p134
      %s136 = ssub.s32 %s18, %s25
      %p137 = scmp.eq.s32.totalorder %s136, 0
      %s139 = sadd.s32 %s138, 1
      %s140 = scalar_select %p137, %s138, %s139
      %p143 = pneg %p137
      %p144 = scmp.eq.s32.totalorder %s18, 1
      %p145 = por %p143, %p144
      %p146 = scmp.ne.s32.totalorder %s138, %s141
      %p147 = scmp.eq.s32.totalorder %s18, 0
      %p148 = por %p146, %p147
      %p149 = scmp.ne.s32.totalorder %s138, %s141
      %p150 = scmp.eq.s32.totalorder %s23, 1
      %p151 = por %p149, %p150
      %p152 = scmp.ne.s32.totalorder %s141, %s142
      %p153 = scmp.eq.s32.totalorder %s23, 0
      %p154 = por %p152, %p153
      %p155 = scmp.ne.s32.totalorder %s141, %s142
      %p156 = scmp.eq.s32.totalorder %s24, 1
      %p157 = por %p155, %p156
      %p159 = scmp.ne.s32.totalorder %s142, %s158
      %p160 = scmp.eq.s32.totalorder %s24, 0
      %p161 = por %p159, %p160
      %p162 = scmp.le.s32.totalorder 1, %s18
      %p163 = scmp.lt.s32.totalorder %s18, 3
      %p164 = pnand %p162, %p163
      %p165 = pneg %p164
      // Predicated region
      $region9: #{tpu_custom_call.1} parent=5 // pred_check
        _
      $region10: #{tpu_custom_call.1} parent=5 // pred_check_branch
        %167 = sbr.rel (%p164) target = $region12
      $region11: #{tpu_custom_call.1} parent=5 // pred_region
        %s168 = ssub.s32 %s18, 1
        // Predicated region
        $region13: #{tpu_custom_call.1} parent=11 // pred_check
          %p169 = pneg %p65
        $region14: #{tpu_custom_call.1} parent=11 // pred_check_branch
          %171 = sbr.rel (%p169) target = $region16
        $region15: #{tpu_custom_call.1} parent=11 // pred_region
          _
        $region16: #{tpu_custom_call.1} parent=11 // pred_fallthru
          _
        // Predicated region
        $region17: #{tpu_custom_call.1} parent=11 // pred_check
          %p172 = pneg %p86
        $region18: #{tpu_custom_call.1} parent=11 // pred_check_branch
          %174 = sbr.rel (%p172) target = $region20
        $region19: #{tpu_custom_call.1} parent=11 // pred_region
          _
        $region20: #{tpu_custom_call.1} parent=11 // pred_fallthru
          _
        // Predicated region
        $region21: #{tpu_custom_call.1} parent=11 // pred_check
          %p175 = pneg %p107
        $region22: #{tpu_custom_call.1} parent=11 // pred_check_branch
          %177 = sbr.rel (%p175) target = $region24
        $region23: #{tpu_custom_call.1} parent=11 // pred_region
          %s179 = ssub.s32 4096, 4096
          %180 = vsyncadd [#allocation6], %s179
          %s181 = sshll.u32 [#allocation5], 4
          %s182 = int_to_ptr.vmem [resolvable:$true] %s181
          %187 = dma.hbm_to_vmem [thread:$0]  %s3, 4096, %s182, [#allocation6], 256, 256, 16
        $region24: #{tpu_custom_call.1} parent=11 // pred_fallthru
          _
        // Predicated region
        $region25: #{tpu_custom_call.1} parent=11 // pred_check
          %p188 = pneg %p128
        $region26: #{tpu_custom_call.1} parent=11 // pred_check_branch
          %190 = sbr.rel (%p188) target = $region28
        $region27: #{tpu_custom_call.1} parent=11 // pred_region
          _
        $region28: #{tpu_custom_call.1} parent=11 // pred_fallthru
          _
      $region12: #{tpu_custom_call.1} parent=5 // pred_fallthru
        _
      %p191 = scmp.lt.s32.totalorder %s18, 2
      // Predicated region
      $region29: #{tpu_custom_call.1} parent=5 // pred_check
        %p192 = pneg %p191
      $region30: #{tpu_custom_call.1} parent=5 // pred_check_branch
        %194 = sbr.rel (%p192) target = $region32
      $region31: #{tpu_custom_call.1} parent=5 // pred_region
        // Predicated region
        $region33: #{tpu_custom_call.1} parent=31 // pred_check
          %p195 = pneg %p38
        $region34: #{tpu_custom_call.1} parent=31 // pred_check_branch
          %197 = sbr.rel (%p195) target = $region36
        $region35: #{tpu_custom_call.1} parent=31 // pred_region
          %s198 = sand.u32 %s28, 1
          %s199 = scalar_lea.sflag [#allocation3], %s198
          %s200 = sand.u32 %s28, 1
          %s201 = smul.addr %s200, 512
          %s202 = scalar_lea.vmem [#allocation2], %s201
          %s204 = ssub.s32 8192, 8192
          %205 = vsyncadd %s199, %s204
          %s206 = smul.addr %s18, 64
          %s207 = smul.addr %s206, 128
          %s208 = scalar_lea.hbm %s0, %s207
          %s209 = sshll.u32 %s202, 4
          %s210 = int_to_ptr.vmem [resolvable:$true] %s209
          %215 = dma.hbm_to_vmem [thread:$0]  %s208, 8192, %s210, %s199, 512, 512, 32
        $region36: #{tpu_custom_call.1} parent=31 // pred_fallthru
          _
      $region32: #{tpu_custom_call.1} parent=5 // pred_fallthru
        _
      %p216 = scmp.le.s32.totalorder 1, %s18
      %p217 = scmp.lt.s32.totalorder %s18, 3
      %p218 = pnand %p216, %p217
      %p219 = pneg %p218
      // Predicated region
      $region37: #{tpu_custom_call.1} parent=5 // pred_check
        _
      $region38: #{tpu_custom_call.1} parent=5 // pred_check_branch
        %221 = sbr.rel (%p218) target = $region40
      $region39: #{tpu_custom_call.1} parent=5 // pred_region
        %s222 = ssub.s32 %s18, 1
        %s223 = sand.u32 %s31, 1
        %s224 = scalar_lea.sflag [#allocation3], %s223
        %s225 = sand.u32 %s31, 1
        %s226 = smul.addr %s225, 512
        %s227 = scalar_lea.vmem [#allocation2], %s226
        // Predicated region
        $region41: #{tpu_custom_call.1} parent=39 // pred_check
          %p228 = pneg %p44
        $region42: #{tpu_custom_call.1} parent=39 // pred_check_branch
          %230 = sbr.rel (%p228) target = $region44
        $region43: #{tpu_custom_call.1} parent=39 // pred_region
          %231 = dma.done %s224, 8192
        $region44: #{tpu_custom_call.1} parent=39 // pred_fallthru
          _
        // Predicated region
        $region45: #{tpu_custom_call.1} parent=39 // pred_check
          %p232 = pneg %p107
        $region46: #{tpu_custom_call.1} parent=39 // pred_check_branch
          %234 = sbr.rel (%p232) target = $region48
        $region47: #{tpu_custom_call.1} parent=39 // pred_region
          %235 = dma.done [#allocation6], 4096
        $region48: #{tpu_custom_call.1} parent=39 // pred_fallthru
          _
        %s236 = sand.u32 %s31, 1
        %s237 = scalar_lea.sflag [#allocation3], %s236
        %s238 = sand.u32 %s31, 1
        %s239 = smul.addr %s238, 512
        %s240 = scalar_lea.vmem [#allocation2], %s239
        %p241 = pneg %p44
        %p242 = pneg %p41
        %p243 = pneg %p65
        %p244 = pneg %p62
        %p245 = pneg %p86
        %p246 = pneg %p83
        %p247 = pneg %p107
        %p248 = pneg %p104
        %p249 = pneg %p128
        %p250 = pneg %p125
        %p251 = pneg %p154
        %p252 = pneg %p151
        %s253 = sand.u32 %s141, 1
        %s254 = scalar_lea.sflag [#allocation4], %s253
        %s255 = sand.u32 %s141, 1
        %s256 = smul.addr %s255, 8
        %s257 = scalar_lea.vmem [#allocation7], %s256
        %v258 = vld [vmem:[%s227] sm:$0xff]
        %v259 = vld [vmem:[%s227 + $0x8] sm:$0xff]
        %v260 = vld [vmem:[%s227 + $0x10] sm:$0xff]
        %v261 = vld [vmem:[%s227 + $0x18] sm:$0xff]
        %v262 = vld [vmem:[%s227 + $0x20] sm:$0xff]
        %v263 = vld [vmem:[%s227 + $0x28] sm:$0xff]
        %v264 = vld [vmem:[%s227 + $0x30] sm:$0xff]
        %v265 = vld [vmem:[%s227 + $0x38] sm:$0xff]
        %v266 = vld [vmem:[%s227 + $0x40] sm:$0xff]
        %v267 = vld [vmem:[%s227 + $0x48] sm:$0xff]
        %v268 = vld [vmem:[%s227 + $0x50] sm:$0xff]
        %v269 = vld [vmem:[%s227 + $0x58] sm:$0xff]
        %v270 = vld [vmem:[%s227 + $0x60] sm:$0xff]
        %v271 = vld [vmem:[%s227 + $0x68] sm:$0xff]
        %v272 = vld [vmem:[%s227 + $0x70] sm:$0xff]
        %v273 = vld [vmem:[%s227 + $0x78] sm:$0xff]
        %v274 = vld [vmem:[%s227 + $0x80] sm:$0xff]
        %v275 = vld [vmem:[%s227 + $0x88] sm:$0xff]
        %v276 = vld [vmem:[%s227 + $0x90] sm:$0xff]
        %v277 = vld [vmem:[%s227 + $0x98] sm:$0xff]
        %v278 = vld [vmem:[%s227 + $0xa0] sm:$0xff]
        %v279 = vld [vmem:[%s227 + $0xa8] sm:$0xff]
        %v280 = vld [vmem:[%s227 + $0xb0] sm:$0xff]
        %v281 = vld [vmem:[%s227 + $0xb8] sm:$0xff]
        %v282 = vld [vmem:[%s227 + $0xc0] sm:$0xff]
        %v283 = vld [vmem:[%s227 + $0xc8] sm:$0xff]
        %v284 = vld [vmem:[%s227 + $0xd0] sm:$0xff]
        %v285 = vld [vmem:[%s227 + $0xd8] sm:$0xff]
        %v286 = vld [vmem:[%s227 + $0xe0] sm:$0xff]
        %v287 = vld [vmem:[%s227 + $0xe8] sm:$0xff]
        %v288 = vld [vmem:[%s227 + $0xf0] sm:$0xff]
        %v289 = vld [vmem:[%s227 + $0xf8] sm:$0xff]
        %v290 = vld [vmem:[%s227 + $0x100] sm:$0xff]
        %v291 = vld [vmem:[%s227 + $0x108] sm:$0xff]
        %v292 = vld [vmem:[%s227 + $0x110] sm:$0xff]
        %v293 = vld [vmem:[%s227 + $0x118] sm:$0xff]
        %v294 = vld [vmem:[%s227 + $0x120] sm:$0xff]
        %v295 = vld [vmem:[%s227 + $0x128] sm:$0xff]
        %v296 = vld [vmem:[%s227 + $0x130] sm:$0xff]
        %v297 = vld [vmem:[%s227 + $0x138] sm:$0xff]
        %v298 = vld [vmem:[%s227 + $0x140] sm:$0xff]
        %v299 = vld [vmem:[%s227 + $0x148] sm:$0xff]
        %v300 = vld [vmem:[%s227 + $0x150] sm:$0xff]
        %v301 = vld [vmem:[%s227 + $0x158] sm:$0xff]
        %v302 = vld [vmem:[%s227 + $0x160] sm:$0xff]
        %v303 = vld [vmem:[%s227 + $0x168] sm:$0xff]
        %v304 = vld [vmem:[%s227 + $0x170] sm:$0xff]
        %v305 = vld [vmem:[%s227 + $0x178] sm:$0xff]
        %v306 = vld [vmem:[%s227 + $0x180] sm:$0xff]
        %v307 = vld [vmem:[%s227 + $0x188] sm:$0xff]
        %v308 = vld [vmem:[%s227 + $0x190] sm:$0xff]
        %v309 = vld [vmem:[%s227 + $0x198] sm:$0xff]
        %v310 = vld [vmem:[%s227 + $0x1a0] sm:$0xff]
        %v311 = vld [vmem:[%s227 + $0x1a8] sm:$0xff]
        %v312 = vld [vmem:[%s227 + $0x1b0] sm:$0xff]
        %v313 = vld [vmem:[%s227 + $0x1b8] sm:$0xff]
        %v314 = vld [vmem:[%s227 + $0x1c0] sm:$0xff]
        %v315 = vld [vmem:[%s227 + $0x1c8] sm:$0xff]
        %v316 = vld [vmem:[%s227 + $0x1d0] sm:$0xff]
        %v317 = vld [vmem:[%s227 + $0x1d8] sm:$0xff]
        %v318 = vld [vmem:[%s227 + $0x1e0] sm:$0xff]
        %v319 = vld [vmem:[%s227 + $0x1e8] sm:$0xff]
        %v320 = vld [vmem:[%s227 + $0x1f0] sm:$0xff]
        %v321 = vld [vmem:[%s227 + $0x1f8] sm:$0xff]
        %v322 = vld [vmem:[%s1] sm:$0xf]
        %v323 = vld [vmem:[%s2] sm:$0xf]
        %325 = vset.pattern.permute.xlu0 0
        %326 = vperm.xlu0 %325, %v323
        %v327 = vpop.permute.xlu0 %326
        %329 = vmatprep.subr.mxu0 %v259
        %330 = vmatpush1.msra.mxu0 %v258
        %331 = vmatprep.subr.mxu0 %v263
        %332 = vmatpush1.msra.mxu0 %v262
        %333 = vmatprep.subr.mxu0 %v267
        %334 = vmatpush1.msra.mxu0 %v266
        %335 = vmatprep.subr.mxu0 %v271
        %336 = vmatpush1.msra.mxu0 %v270
        %337 = vmatprep.subr.mxu0 %v275
        %338 = vmatpush1.msra.mxu0 %v274
        %339 = vmatprep.subr.mxu0 %v279
        %340 = vmatpush1.msra.mxu0 %v278
        %341 = vmatprep.subr.mxu0 %v283
        %342 = vmatpush1.msra.mxu0 %v282
        %343 = vmatprep.subr.mxu0 %v287
        %344 = vmatpush1.msra.mxu0 %v286
        %345 = vmatprep.subr.mxu0 %v291
        %346 = vmatpush1.msra.mxu0 %v290
        %347 = vmatprep.subr.mxu0 %v295
        %348 = vmatpush1.msra.mxu0 %v294
        %349 = vmatprep.subr.mxu0 %v299
        %350 = vmatpush1.msra.mxu0 %v298
        %351 = vmatprep.subr.mxu0 %v303
        %352 = vmatpush1.msra.mxu0 %v302
        %353 = vmatprep.subr.mxu0 %v307
        %354 = vmatpush1.msra.mxu0 %v306
        %355 = vmatprep.subr.mxu0 %v311
        %356 = vmatpush1.msra.mxu0 %v310
        %357 = vmatprep.subr.mxu0 %v315
        %358 = vmatpush1.msra.mxu0 %v314
        %359 = vmatprep.subr.mxu0 %v319
        %360 = vmatpush1.msra.mxu0 %v318
        %361 = vmatprep.subr.mxu0 0.0
        %362 = vmatpush1.msra.mxu0 0.0
        %363 = vmatprep.subr.mxu0 0.0
        %364 = vmatpush1.msra.mxu0 0.0
        %365 = vmatprep.subr.mxu0 0.0
        %366 = vmatpush1.msra.mxu0 0.0
        %367 = vmatprep.subr.mxu0 0.0
        %368 = vmatpush1.msra.mxu0 0.0
        %369 = vmatprep.subr.mxu0 0.0
        %370 = vmatpush1.msra.mxu0 0.0
        %371 = vmatprep.subr.mxu0 0.0
        %372 = vmatpush1.msra.mxu0 0.0
        %373 = vmatprep.subr.mxu0 0.0
        %374 = vmatpush1.msra.mxu0 0.0
        %375 = vmatprep.subr.mxu0 0.0
        %376 = vmatpush1.msra.mxu0 0.0
        %377 = vmatprep.subr.mxu0 0.0
        %378 = vmatpush1.msra.mxu0 0.0
        %379 = vmatprep.subr.mxu0 0.0
        %380 = vmatpush1.msra.mxu0 0.0
        %381 = vmatprep.subr.mxu0 0.0
        %382 = vmatpush1.msra.mxu0 0.0
        %383 = vmatprep.subr.mxu0 0.0
        %384 = vmatpush1.msra.mxu0 0.0
        %385 = vmatprep.subr.mxu0 0.0
        %386 = vmatpush1.msra.mxu0 0.0
        %387 = vmatprep.subr.mxu0 0.0
        %388 = vmatpush1.msra.mxu0 0.0
        %389 = vmatprep.subr.mxu0 0.0
        %390 = vmatpush1.msra.mxu0 0.0
        %391 = vmatprep.subr.mxu0 0.0
        %392 = vmatpush1.msra.mxu0 0.0
        %393 = vmatprep.mubr.f32.mxu0 0.0
        %394 = vmatmul.mubr.f32.gmra.mrb[0].mxu0 %v322
        %v395 = vpop.f32.mrb[0].mxu0
        %v396 = vadd.f32 %v327, %v395
        %v397 = vpop.f32.mrb[0].mxu0
        %v398 = vadd.f32 %v327, %v397
        %399 = vdwg.mxu0
        %400 = vmatprep.subr.mxu0 %v261
        %401 = vmatpush1.msra.mxu0 %v260
        %402 = vmatprep.subr.mxu0 %v265
        %403 = vmatpush1.msra.mxu0 %v264
        %404 = vmatprep.subr.mxu0 %v269
        %405 = vmatpush1.msra.mxu0 %v268
        %406 = vmatprep.subr.mxu0 %v273
        %407 = vmatpush1.msra.mxu0 %v272
        %408 = vmatprep.subr.mxu0 %v277
        %409 = vmatpush1.msra.mxu0 %v276
        %410 = vmatprep.subr.mxu0 %v281
        %411 = vmatpush1.msra.mxu0 %v280
        %412 = vmatprep.subr.mxu0 %v285
        %413 = vmatpush1.msra.mxu0 %v284
        %414 = vmatprep.subr.mxu0 %v289
        %415 = vmatpush1.msra.mxu0 %v288
        %416 = vmatprep.subr.mxu0 %v293
        %417 = vmatpush1.msra.mxu0 %v292
        %418 = vmatprep.subr.mxu0 %v297
        %419 = vmatpush1.msra.mxu0 %v296
        %420 = vmatprep.subr.mxu0 %v301
        %421 = vmatpush1.msra.mxu0 %v300
        %422 = vmatprep.subr.mxu0 %v305
        %423 = vmatpush1.msra.mxu0 %v304
        %424 = vmatprep.subr.mxu0 %v309
        %425 = vmatpush1.msra.mxu0 %v308
        %426 = vmatprep.subr.mxu0 %v313
        %427 = vmatpush1.msra.mxu0 %v312
        %428 = vmatprep.subr.mxu0 %v317
        %429 = vmatpush1.msra.mxu0 %v316
        %430 = vmatprep.subr.mxu0 %v321
        %431 = vmatpush1.msra.mxu0 %v320
        %432 = vmatprep.subr.mxu0 0.0
        %433 = vmatpush1.msra.mxu0 0.0
        %434 = vmatprep.subr.mxu0 0.0
        %435 = vmatpush1.msra.mxu0 0.0
        %436 = vmatprep.subr.mxu0 0.0
        %437 = vmatpush1.msra.mxu0 0.0
        %438 = vmatprep.subr.mxu0 0.0
        %439 = vmatpush1.msra.mxu0 0.0
        %440 = vmatprep.subr.mxu0 0.0
        %441 = vmatpush1.msra.mxu0 0.0
        %442 = vmatprep.subr.mxu0 0.0
        %443 = vmatpush1.msra.mxu0 0.0
        %444 = vmatprep.subr.mxu0 0.0
        %445 = vmatpush1.msra.mxu0 0.0
        %446 = vmatprep.subr.mxu0 0.0
        %447 = vmatpush1.msra.mxu0 0.0
        %448 = vmatprep.subr.mxu0 0.0
        %449 = vmatpush1.msra.mxu0 0.0
        %450 = vmatprep.subr.mxu0 0.0
        %451 = vmatpush1.msra.mxu0 0.0
        %452 = vmatprep.subr.mxu0 0.0
        %453 = vmatpush1.msra.mxu0 0.0
        %454 = vmatprep.subr.mxu0 0.0
        %455 = vmatpush1.msra.mxu0 0.0
        %456 = vmatprep.subr.mxu0 0.0
        %457 = vmatpush1.msra.mxu0 0.0
        %458 = vmatprep.subr.mxu0 0.0
        %459 = vmatpush1.msra.mxu0 0.0
        %460 = vmatprep.subr.mxu0 0.0
        %461 = vmatpush1.msra.mxu0 0.0
        %462 = vmatprep.subr.mxu0 0.0
        %463 = vmatpush1.msra.mxu0 0.0
        %464 = vmatprep.mubr.f32.mxu0 0.0
        %465 = vmatmul.mubr.f32.gmra.mrb[0].mxu0 %v322
        %v466 = vpop.f32.mrb[0].mxu0
        %v467 = vadd.f32 %v327, %v466
        %v468 = vpop.f32.mrb[0].mxu0
        %v469 = vadd.f32 %v327, %v468
        %470 = vdwg.mxu0
        %v471 = vmax.f32 %v396, 0.0
        %v472 = vmax.f32 %v398, 0.0
        %v473 = vmax.f32 %v467, 0.0
        %v474 = vmax.f32 %v469, 0.0
        %v475 = vld [vmem:[#allocation5] sm:$0xff]
        %v476 = vld [vmem:[#allocation5 + $0x8] sm:$0xff]
        %v477 = vld [vmem:[#allocation5 + $0x10] sm:$0xff]
        %v478 = vld [vmem:[#allocation5 + $0x18] sm:$0xff]
        %v479 = vld [vmem:[#allocation5 + $0x20] sm:$0xff]
        %v480 = vld [vmem:[#allocation5 + $0x28] sm:$0xff]
        %v481 = vld [vmem:[#allocation5 + $0x30] sm:$0xff]
        %v482 = vld [vmem:[#allocation5 + $0x38] sm:$0xff]
        %v483 = vld [vmem:[#allocation5 + $0x40] sm:$0xff]
        %v484 = vld [vmem:[#allocation5 + $0x48] sm:$0xff]
        %v485 = vld [vmem:[#allocation5 + $0x50] sm:$0xff]
        %v486 = vld [vmem:[#allocation5 + $0x58] sm:$0xff]
        %v487 = vld [vmem:[#allocation5 + $0x60] sm:$0xff]
        %v488 = vld [vmem:[#allocation5 + $0x68] sm:$0xff]
        %v489 = vld [vmem:[#allocation5 + $0x70] sm:$0xff]
        %v490 = vld [vmem:[#allocation5 + $0x78] sm:$0xff]
        %v491 = vld [vmem:[#allocation5 + $0x80] sm:$0xff]
        %v492 = vld [vmem:[#allocation5 + $0x88] sm:$0xff]
        %v493 = vld [vmem:[#allocation5 + $0x90] sm:$0xff]
        %v494 = vld [vmem:[#allocation5 + $0x98] sm:$0xff]
        %v495 = vld [vmem:[#allocation5 + $0xa0] sm:$0xff]
        %v496 = vld [vmem:[#allocation5 + $0xa8] sm:$0xff]
        %v497 = vld [vmem:[#allocation5 + $0xb0] sm:$0xff]
        %v498 = vld [vmem:[#allocation5 + $0xb8] sm:$0xff]
        %v499 = vld [vmem:[#allocation5 + $0xc0] sm:$0xff]
        %v500 = vld [vmem:[#allocation5 + $0xc8] sm:$0xff]
        %v501 = vld [vmem:[#allocation5 + $0xd0] sm:$0xff]
        %v502 = vld [vmem:[#allocation5 + $0xd8] sm:$0xff]
        %v503 = vld [vmem:[#allocation5 + $0xe0] sm:$0xff]
        %v504 = vld [vmem:[#allocation5 + $0xe8] sm:$0xff]
        %v505 = vld [vmem:[#allocation5 + $0xf0] sm:$0xff]
        %v506 = vld [vmem:[#allocation5 + $0xf8] sm:$0xff]
        %v507 = vunpack.c.0.s8 %v475
        %v508 = vunpack.c.0.s8 %v476
        %v509 = vunpack.c.1.s8 %v475
        %v510 = vunpack.c.1.s8 %v476
        %v511 = vunpack.c.2.s8 %v475
        %v512 = vunpack.c.2.s8 %v476
        %v513 = vunpack.c.3.s8 %v475
        %v514 = vunpack.c.3.s8 %v476
        %v515 = vunpack.c.0.s8 %v477
        %v516 = vunpack.c.0.s8 %v478
        %v517 = vunpack.c.1.s8 %v477
        %v518 = vunpack.c.1.s8 %v478
        %v519 = vunpack.c.2.s8 %v477
        %v520 = vunpack.c.2.s8 %v478
        %v521 = vunpack.c.3.s8 %v477
        %v522 = vunpack.c.3.s8 %v478
        %v523 = vunpack.c.0.s8 %v479
        %v524 = vunpack.c.0.s8 %v480
        %v525 = vunpack.c.1.s8 %v479
        %v526 = vunpack.c.1.s8 %v480
        %v527 = vunpack.c.2.s8 %v479
        %v528 = vunpack.c.2.s8 %v480
        %v529 = vunpack.c.3.s8 %v479
        %v530 = vunpack.c.3.s8 %v480
        %v531 = vunpack.c.0.s8 %v481
        %v532 = vunpack.c.0.s8 %v482
        %v533 = vunpack.c.1.s8 %v481
        %v534 = vunpack.c.1.s8 %v482
        %v535 = vunpack.c.2.s8 %v481
        %v536 = vunpack.c.2.s8 %v482
        %v537 = vunpack.c.3.s8 %v481
        %v538 = vunpack.c.3.s8 %v482
        %v539 = vunpack.c.0.s8 %v483
        %v540 = vunpack.c.0.s8 %v484
        %v541 = vunpack.c.1.s8 %v483
        %v542 = vunpack.c.1.s8 %v484
        %v543 = vunpack.c.2.s8 %v483
        %v544 = vunpack.c.2.s8 %v484
        %v545 = vunpack.c.3.s8 %v483
        %v546 = vunpack.c.3.s8 %v484
        %v547 = vunpack.c.0.s8 %v485
        %v548 = vunpack.c.0.s8 %v486
        %v549 = vunpack.c.1.s8 %v485
        %v550 = vunpack.c.1.s8 %v486
        %v551 = vunpack.c.2.s8 %v485
        %v552 = vunpack.c.2.s8 %v486
        %v553 = vunpack.c.3.s8 %v485
        %v554 = vunpack.c.3.s8 %v486
        %v555 = vunpack.c.0.s8 %v487
        %v556 = vunpack.c.0.s8 %v488
        %v557 = vunpack.c.1.s8 %v487
        %v558 = vunpack.c.1.s8 %v488
        %v559 = vunpack.c.2.s8 %v487
        %v560 = vunpack.c.2.s8 %v488
        %v561 = vunpack.c.3.s8 %v487
        %v562 = vunpack.c.3.s8 %v488
        %v563 = vunpack.c.0.s8 %v489
        %v564 = vunpack.c.0.s8 %v490
        %v565 = vunpack.c.1.s8 %v489
        %v566 = vunpack.c.1.s8 %v490
        %v567 = vunpack.c.2.s8 %v489
        %v568 = vunpack.c.2.s8 %v490
        %v569 = vunpack.c.3.s8 %v489
        %v570 = vunpack.c.3.s8 %v490
        %v571 = vunpack.c.0.s8 %v491
        %v572 = vunpack.c.0.s8 %v492
        %v573 = vunpack.c.1.s8 %v491
        %v574 = vunpack.c.1.s8 %v492
        %v575 = vunpack.c.2.s8 %v491
        %v576 = vunpack.c.2.s8 %v492
        %v577 = vunpack.c.3.s8 %v491
        %v578 = vunpack.c.3.s8 %v492
        %v579 = vunpack.c.0.s8 %v493
        %v580 = vunpack.c.0.s8 %v494
        %v581 = vunpack.c.1.s8 %v493
        %v582 = vunpack.c.1.s8 %v494
        %v583 = vunpack.c.2.s8 %v493
        %v584 = vunpack.c.2.s8 %v494
        %v585 = vunpack.c.3.s8 %v493
        %v586 = vunpack.c.3.s8 %v494
        %v587 = vunpack.c.0.s8 %v495
        %v588 = vunpack.c.0.s8 %v496
        %v589 = vunpack.c.1.s8 %v495
        %v590 = vunpack.c.1.s8 %v496
        %v591 = vunpack.c.2.s8 %v495
        %v592 = vunpack.c.2.s8 %v496
        %v593 = vunpack.c.3.s8 %v495
        %v594 = vunpack.c.3.s8 %v496
        %v595 = vunpack.c.0.s8 %v497
        %v596 = vunpack.c.0.s8 %v498
        %v597 = vunpack.c.1.s8 %v497
        %v598 = vunpack.c.1.s8 %v498
        %v599 = vunpack.c.2.s8 %v497
        %v600 = vunpack.c.2.s8 %v498
        %v601 = vunpack.c.3.s8 %v497
        %v602 = vunpack.c.3.s8 %v498
        %v603 = vunpack.c.0.s8 %v499
        %v604 = vunpack.c.0.s8 %v500
        %v605 = vunpack.c.1.s8 %v499
        %v606 = vunpack.c.1.s8 %v500
        %v607 = vunpack.c.2.s8 %v499
        %v608 = vunpack.c.2.s8 %v500
        %v609 = vunpack.c.3.s8 %v499
        %v610 = vunpack.c.3.s8 %v500
        %v611 = vunpack.c.0.s8 %v501
        %v612 = vunpack.c.0.s8 %v502
        %v613 = vunpack.c.1.s8 %v501
        %v614 = vunpack.c.1.s8 %v502
        %v615 = vunpack.c.2.s8 %v501
        %v616 = vunpack.c.2.s8 %v502
        %v617 = vunpack.c.3.s8 %v501
        %v618 = vunpack.c.3.s8 %v502
        %v619 = vunpack.c.0.s8 %v503
        %v620 = vunpack.c.0.s8 %v504
        %v621 = vunpack.c.1.s8 %v503
        %v622 = vunpack.c.1.s8 %v504
        %v623 = vunpack.c.2.s8 %v503
        %v624 = vunpack.c.2.s8 %v504
        %v625 = vunpack.c.3.s8 %v503
        %v626 = vunpack.c.3.s8 %v504
        %v627 = vunpack.c.0.s8 %v505
        %v628 = vunpack.c.0.s8 %v506
        %v629 = vunpack.c.1.s8 %v505
        %v630 = vunpack.c.1.s8 %v506
        %v631 = vunpack.c.2.s8 %v505
        %v632 = vunpack.c.2.s8 %v506
        %v633 = vunpack.c.3.s8 %v505
        %v634 = vunpack.c.3.s8 %v506
        %v635 = vcvt.s32.f32 %v507
        %v636 = vcvt.s32.f32 %v508
        %v637 = vcvt.s32.f32 %v509
        %v638 = vcvt.s32.f32 %v510
        %v639 = vcvt.s32.f32 %v511
        %v640 = vcvt.s32.f32 %v512
        %v641 = vcvt.s32.f32 %v513
        %v642 = vcvt.s32.f32 %v514
        %v643 = vcvt.s32.f32 %v515
        %v644 = vcvt.s32.f32 %v516
        %v645 = vcvt.s32.f32 %v517
        %v646 = vcvt.s32.f32 %v518
        %v647 = vcvt.s32.f32 %v519
        %v648 = vcvt.s32.f32 %v520
        %v649 = vcvt.s32.f32 %v521
        %v650 = vcvt.s32.f32 %v522
        %v651 = vcvt.s32.f32 %v523
        %v652 = vcvt.s32.f32 %v524
        %v653 = vcvt.s32.f32 %v525
        %v654 = vcvt.s32.f32 %v526
        %v655 = vcvt.s32.f32 %v527
        %v656 = vcvt.s32.f32 %v528
        %v657 = vcvt.s32.f32 %v529
        %v658 = vcvt.s32.f32 %v530
        %v659 = vcvt.s32.f32 %v531
        %v660 = vcvt.s32.f32 %v532
        %v661 = vcvt.s32.f32 %v533
        %v662 = vcvt.s32.f32 %v534
        %v663 = vcvt.s32.f32 %v535
        %v664 = vcvt.s32.f32 %v536
        %v665 = vcvt.s32.f32 %v537
        %v666 = vcvt.s32.f32 %v538
        %v667 = vcvt.s32.f32 %v539
        %v668 = vcvt.s32.f32 %v540
        %v669 = vcvt.s32.f32 %v541
        %v670 = vcvt.s32.f32 %v542
        %v671 = vcvt.s32.f32 %v543
        %v672 = vcvt.s32.f32 %v544
        %v673 = vcvt.s32.f32 %v545
        %v674 = vcvt.s32.f32 %v546
        %v675 = vcvt.s32.f32 %v547
        %v676 = vcvt.s32.f32 %v548
        %v677 = vcvt.s32.f32 %v549
        %v678 = vcvt.s32.f32 %v550
        %v679 = vcvt.s32.f32 %v551
        %v680 = vcvt.s32.f32 %v552
        %v681 = vcvt.s32.f32 %v553
        %v682 = vcvt.s32.f32 %v554
        %v683 = vcvt.s32.f32 %v555
        %v684 = vcvt.s32.f32 %v556
        %v685 = vcvt.s32.f32 %v557
        %v686 = vcvt.s32.f32 %v558
        %v687 = vcvt.s32.f32 %v559
        %v688 = vcvt.s32.f32 %v560
        %v689 = vcvt.s32.f32 %v561
        %v690 = vcvt.s32.f32 %v562
        %v691 = vcvt.s32.f32 %v563
        %v692 = vcvt.s32.f32 %v564
        %v693 = vcvt.s32.f32 %v565
        %v694 = vcvt.s32.f32 %v566
        %v695 = vcvt.s32.f32 %v567
        %v696 = vcvt.s32.f32 %v568
        %v697 = vcvt.s32.f32 %v569
        %v698 = vcvt.s32.f32 %v570
        %v699 = vcvt.s32.f32 %v571
        %v700 = vcvt.s32.f32 %v572
        %v701 = vcvt.s32.f32 %v573
        %v702 = vcvt.s32.f32 %v574
        %v703 = vcvt.s32.f32 %v575
        %v704 = vcvt.s32.f32 %v576
        %v705 = vcvt.s32.f32 %v577
        %v706 = vcvt.s32.f32 %v578
        %v707 = vcvt.s32.f32 %v579
        %v708 = vcvt.s32.f32 %v580
        %v709 = vcvt.s32.f32 %v581
        %v710 = vcvt.s32.f32 %v582
        %v711 = vcvt.s32.f32 %v583
        %v712 = vcvt.s32.f32 %v584
        %v713 = vcvt.s32.f32 %v585
        %v714 = vcvt.s32.f32 %v586
        %v715 = vcvt.s32.f32 %v587
        %v716 = vcvt.s32.f32 %v588
        %v717 = vcvt.s32.f32 %v589
        %v718 = vcvt.s32.f32 %v590
        %v719 = vcvt.s32.f32 %v591
        %v720 = vcvt.s32.f32 %v592
        %v721 = vcvt.s32.f32 %v593
        %v722 = vcvt.s32.f32 %v594
        %v723 = vcvt.s32.f32 %v595
        %v724 = vcvt.s32.f32 %v596
        %v725 = vcvt.s32.f32 %v597
        %v726 = vcvt.s32.f32 %v598
        %v727 = vcvt.s32.f32 %v599
        %v728 = vcvt.s32.f32 %v600
        %v729 = vcvt.s32.f32 %v601
        %v730 = vcvt.s32.f32 %v602
        %v731 = vcvt.s32.f32 %v603
        %v732 = vcvt.s32.f32 %v604
        %v733 = vcvt.s32.f32 %v605
        %v734 = vcvt.s32.f32 %v606
        %v735 = vcvt.s32.f32 %v607
        %v736 = vcvt.s32.f32 %v608
        %v737 = vcvt.s32.f32 %v609
        %v738 = vcvt.s32.f32 %v610
        %v739 = vcvt.s32.f32 %v611
        %v740 = vcvt.s32.f32 %v612
        %v741 = vcvt.s32.f32 %v613
        %v742 = vcvt.s32.f32 %v614
        %v743 = vcvt.s32.f32 %v615
        %v744 = vcvt.s32.f32 %v616
        %v745 = vcvt.s32.f32 %v617
        %v746 = vcvt.s32.f32 %v618
        %v747 = vcvt.s32.f32 %v619
        %v748 = vcvt.s32.f32 %v620
        %v749 = vcvt.s32.f32 %v621
        %v750 = vcvt.s32.f32 %v622
        %v751 = vcvt.s32.f32 %v623
        %v752 = vcvt.s32.f32 %v624
        %v753 = vcvt.s32.f32 %v625
        %v754 = vcvt.s32.f32 %v626
        %v755 = vcvt.s32.f32 %v627
        %v756 = vcvt.s32.f32 %v628
        %v757 = vcvt.s32.f32 %v629
        %v758 = vcvt.s32.f32 %v630
        %v759 = vcvt.s32.f32 %v631
        %v760 = vcvt.s32.f32 %v632
        %v761 = vcvt.s32.f32 %v633
        %v762 = vcvt.s32.f32 %v634
        %763 = vmatprep.subr.mxu0 %v636
        %764 = vmatpush1.msra.mxu0 %v635
        %765 = vmatprep.subr.mxu0 %v638
        %766 = vmatpush1.msra.mxu0 %v637
        %767 = vmatprep.subr.mxu0 %v640
        %768 = vmatpush1.msra.mxu0 %v639
        %769 = vmatprep.subr.mxu0 %v642
        %770 = vmatpush1.msra.mxu0 %v641
        %771 = vmatprep.subr.mxu0 %v644
        %772 = vmatpush1.msra.mxu0 %v643
        %773 = vmatprep.subr.mxu0 %v646
        %774 = vmatpush1.msra.mxu0 %v645
        %775 = vmatprep.subr.mxu0 %v648
        %776 = vmatpush1.msra.mxu0 %v647
        %777 = vmatprep.subr.mxu0 %v650
        %778 = vmatpush1.msra.mxu0 %v649
        %779 = vmatprep.subr.mxu0 %v652
        %780 = vmatpush1.msra.mxu0 %v651
        %781 = vmatprep.subr.mxu0 %v654
        %782 = vmatpush1.msra.mxu0 %v653
        %783 = vmatprep.subr.mxu0 %v656
        %784 = vmatpush1.msra.mxu0 %v655
        %785 = vmatprep.subr.mxu0 %v658
        %786 = vmatpush1.msra.mxu0 %v657
        %787 = vmatprep.subr.mxu0 %v660
        %788 = vmatpush1.msra.mxu0 %v659
        %789 = vmatprep.subr.mxu0 %v662
        %790 = vmatpush1.msra.mxu0 %v661
        %791 = vmatprep.subr.mxu0 %v664
        %792 = vmatpush1.msra.mxu0 %v663
        %793 = vmatprep.subr.mxu0 %v666
        %794 = vmatpush1.msra.mxu0 %v665
        %795 = vmatprep.subr.mxu0 %v668
        %796 = vmatpush1.msra.mxu0 %v667
        %797 = vmatprep.subr.mxu0 %v670
        %798 = vmatpush1.msra.mxu0 %v669
        %799 = vmatprep.subr.mxu0 %v672
        %800 = vmatpush1.msra.mxu0 %v671
        %801 = vmatprep.subr.mxu0 %v674
        %802 = vmatpush1.msra.mxu0 %v673
        %803 = vmatprep.subr.mxu0 %v676
        %804 = vmatpush1.msra.mxu0 %v675
        %805 = vmatprep.subr.mxu0 %v678
        %806 = vmatpush1.msra.mxu0 %v677
        %807 = vmatprep.subr.mxu0 %v680
        %808 = vmatpush1.msra.mxu0 %v679
        %809 = vmatprep.subr.mxu0 %v682
        %810 = vmatpush1.msra.mxu0 %v681
        %811 = vmatprep.subr.mxu0 %v684
        %812 = vmatpush1.msra.mxu0 %v683
        %813 = vmatprep.subr.mxu0 %v686
        %814 = vmatpush1.msra.mxu0 %v685
        %815 = vmatprep.subr.mxu0 %v688
        %816 = vmatpush1.msra.mxu0 %v687
        %817 = vmatprep.subr.mxu0 %v690
        %818 = vmatpush1.msra.mxu0 %v689
        %819 = vmatprep.subr.mxu0 %v692
        %820 = vmatpush1.msra.mxu0 %v691
        %821 = vmatprep.subr.mxu0 %v694
        %822 = vmatpush1.msra.mxu0 %v693
        %823 = vmatprep.subr.mxu0 %v696
        %824 = vmatpush1.msra.mxu0 %v695
        %825 = vmatprep.subr.mxu0 %v698
        %826 = vmatpush1.msra.mxu0 %v697
        %827 = vmatprep.mubr.f32.mxu0 %v472
        %828 = vmatmul.mubr.f32.gmra.mrb[0].mxu0 %v471
        %v829 = vpop.f32.mrb[0].mxu0
        %v830 = vadd.f32 0.0, %v829
        %v831 = vpop.f32.mrb[0].mxu0
        %v832 = vadd.f32 0.0, %v831
        %833 = vdwg.mxu0
        %834 = vmatprep.subr.mxu0 %v700
        %835 = vmatpush1.msra.mxu0 %v699
        %836 = vmatprep.subr.mxu0 %v702
        %837 = vmatpush1.msra.mxu0 %v701
        %838 = vmatprep.subr.mxu0 %v704
        %839 = vmatpush1.msra.mxu0 %v703
        %840 = vmatprep.subr.mxu0 %v706
        %841 = vmatpush1.msra.mxu0 %v705
        %842 = vmatprep.subr.mxu0 %v708
        %843 = vmatpush1.msra.mxu0 %v707
        %844 = vmatprep.subr.mxu0 %v710
        %845 = vmatpush1.msra.mxu0 %v709
        %846 = vmatprep.subr.mxu0 %v712
        %847 = vmatpush1.msra.mxu0 %v711
        %848 = vmatprep.subr.mxu0 %v714
        %849 = vmatpush1.msra.mxu0 %v713
        %850 = vmatprep.subr.mxu0 %v716
        %851 = vmatpush1.msra.mxu0 %v715
        %852 = vmatprep.subr.mxu0 %v718
        %853 = vmatpush1.msra.mxu0 %v717
        %854 = vmatprep.subr.mxu0 %v720
        %855 = vmatpush1.msra.mxu0 %v719
        %856 = vmatprep.subr.mxu0 %v722
        %857 = vmatpush1.msra.mxu0 %v721
        %858 = vmatprep.subr.mxu0 %v724
        %859 = vmatpush1.msra.mxu0 %v723
        %860 = vmatprep.subr.mxu0 %v726
        %861 = vmatpush1.msra.mxu0 %v725
        %862 = vmatprep.subr.mxu0 %v728
        %863 = vmatpush1.msra.mxu0 %v727
        %864 = vmatprep.subr.mxu0 %v730
        %865 = vmatpush1.msra.mxu0 %v729
        %866 = vmatprep.subr.mxu0 %v732
        %867 = vmatpush1.msra.mxu0 %v731
        %868 = vmatprep.subr.mxu0 %v734
        %869 = vmatpush1.msra.mxu0 %v733
        %870 = vmatprep.subr.mxu0 %v736
        %871 = vmatpush1.msra.mxu0 %v735
        %872 = vmatprep.subr.mxu0 %v738
        %873 = vmatpush1.msra.mxu0 %v737
        %874 = vmatprep.subr.mxu0 %v740
        %875 = vmatpush1.msra.mxu0 %v739
        %876 = vmatprep.subr.mxu0 %v742
        %877 = vmatpush1.msra.mxu0 %v741
        %878 = vmatprep.subr.mxu0 %v744
        %879 = vmatpush1.msra.mxu0 %v743
        %880 = vmatprep.subr.mxu0 %v746
        %881 = vmatpush1.msra.mxu0 %v745
        %882 = vmatprep.subr.mxu0 %v748
        %883 = vmatpush1.msra.mxu0 %v747
        %884 = vmatprep.subr.mxu0 %v750
        %885 = vmatpush1.msra.mxu0 %v749
        %886 = vmatprep.subr.mxu0 %v752
        %887 = vmatpush1.msra.mxu0 %v751
        %888 = vmatprep.subr.mxu0 %v754
        %889 = vmatpush1.msra.mxu0 %v753
        %890 = vmatprep.subr.mxu0 %v756
        %891 = vmatpush1.msra.mxu0 %v755
        %892 = vmatprep.subr.mxu0 %v758
        %893 = vmatpush1.msra.mxu0 %v757
        %894 = vmatprep.subr.mxu0 %v760
        %895 = vmatpush1.msra.mxu0 %v759
        %896 = vmatprep.subr.mxu0 %v762
        %897 = vmatpush1.msra.mxu0 %v761
        %898 = vmatprep.mubr.f32.mxu0 %v474
        %899 = vmatmul.mubr.f32.gmra.mrb[0].mxu0 %v473
        %v900 = vpop.f32.mrb[0].mxu0
        %v901 = vadd.f32 %v830, %v900
        %v902 = vpop.f32.mrb[0].mxu0
        %v903 = vadd.f32 %v832, %v902
        %904 = vdwg.mxu0
        %v905 = vld [vmem:[%s4] sm:$0x3]
        %v907 = vlaneseq
        %v908 = vshrl.u32 %v907, 7
        %v909 = vsub.s32 0, %v908
        %v910 = vrot.slane %v905, %v909
        %v911 = vlaneseq
        %v912 = vshrl.u32 %v911, 7
        %v913 = vsub.s32 1, %v912
        %v914 = vrot.slane %v905, %v913
        %v917 = vmul.f32 %v901, %v910
        %v918 = vmul.f32 %v903, %v914
        %v921 = vcombine.low %v917, %v918
        %923 = vst [vmem:[%s257] sm:$0xff] %v921
        %s924 = sand.u32 %s141, 1
        %s925 = scalar_lea.sflag [#allocation4], %s924
        %s926 = sand.u32 %s141, 1
        %s927 = smul.addr %s926, 8
        %s928 = scalar_lea.vmem [#allocation7], %s927
        // Predicated region
        $region49: #{tpu_custom_call.1} parent=39 // pred_check
          %p929 = pneg %p151
        $region50: #{tpu_custom_call.1} parent=39 // pred_check_branch
          %931 = sbr.rel (%p929) target = $region52
        $region51: #{tpu_custom_call.1} parent=39 // pred_region
          %s933 = ssub.s32 128, 128
          %934 = vsyncadd %s925, %s933
          %s935 = smul.addr %s23, 2
          %s936 = smul.addr %s935, 64
          %s937 = scalar_lea.hbm %s5, %s936
          %s939 = sshll.u32 %s928, 4
          %s940 = int_to_ptr.vmem [resolvable:$true] %s939
          %942 = dma.vmem_to_hbm [thread:$0]  %s940, 128, %s937, %s925
        $region52: #{tpu_custom_call.1} parent=39 // pred_fallthru
          _
      $region40: #{tpu_custom_call.1} parent=5 // pred_fallthru
        _
      %p943 = scmp.le.s32.totalorder 2, %s18
      // Predicated region
      $region53: #{tpu_custom_call.1} parent=5 // pred_check
        %p944 = pneg %p943
      $region54: #{tpu_custom_call.1} parent=5 // pred_check_branch
        %946 = sbr.rel (%p944) target = $region56
      $region55: #{tpu_custom_call.1} parent=5 // pred_region
        %s947 = ssub.s32 %s18, 2
        // Predicated region
        $region57: #{tpu_custom_call.1} parent=55 // pred_check
          %p948 = pneg %p157
        $region58: #{tpu_custom_call.1} parent=55 // pred_check_branch
          %950 = sbr.rel (%p948) target = $region60
        $region59: #{tpu_custom_call.1} parent=55 // pred_region
          %s951 = sand.u32 %s142, 1
          %s952 = scalar_lea.sflag [#allocation4], %s951
          %s953 = sand.u32 %s142, 1
          %s954 = smul.addr %s953, 8
          %s955 = scalar_lea.vmem [#allocation7], %s954
          %956 = dma.done %s952, 128
        $region60: #{tpu_custom_call.1} parent=55 // pred_fallthru
          _
      $region56: #{tpu_custom_call.1} parent=5 // pred_fallthru
        _
    $region6: #{tpu_custom_call.1} parent=1 // loop_footer
      %s22 = sadd.s32 1, %s18
    $region7: #{tpu_custom_call.1} parent=1 // loop_footer_branch
      %17 = sbr.rel target = $region3
    $region8: #{tpu_custom_call.1} parent=1 // loop_exit
      _
    %957 = vsyncpa [#allocation3], 1
    %s958 = scalar_lea.sflag [#allocation3], 1
    %959 = vsyncpa %s958, 1
    %960 = vsyncpa [#allocation6], 1
    %961 = vsyncpa [#allocation4], 1
    %s962 = scalar_lea.sflag [#allocation4], 1
    %963 = vsyncpa %s962, 1

</llo_original>
